<compile_context>
chip_gen: v6e
topology: v6e:2x2x1
jax: 0.10.0
libtpu: 0.0.40
codegen_flags: <defaults>
</compile_context>

<pallas_src>
import jax
import jax.numpy as jnp
from jax.experimental import pallas as pl
from jax.experimental.pallas import tpu as pltpu


_LANE_CHUNK = 2048            # batch columns per in-kernel sub-step (bounds live VMEM)
_GRIDLESS_MAX_B = 16384       # largest batch routed through the whole-array path
_VMEM_LIMIT = 32 * 1024 * 1024


# ---------------------------------------------------------------------------
# Column-slab compute helpers (feature-major: batch on lanes)
# ---------------------------------------------------------------------------

def _mlp_columns(x_cols, w1_cols, b1c, w2_cols, b2c):
    """Two-layer MLP on a feature-major slab of batch columns (VPU/XLU/EUP only).

    x_cols : (in_f, n)           input columns (batch on lanes)
    w1_cols: [in_f] x (H, 1|n)   layer-1 weight columns (optionally pre-broadcast)
    b1c    : (H, 1)
    w2_cols: [C] x (H, 1|n)      layer-2 weight columns (optionally pre-broadcast)
    b2c    : (C, 1)
    returns (C, n) float32.
    """
    # Layer 1: h[j, b] = sum_k w1[j, k] * x[k, b] + b1[j]
    # x rows sublane-broadcast (stride-0 read); unrolled FMA chain, no MXU.
    h = b1c                                   # broadcasts to (H, n) on first FMA
    for k, w1k in enumerate(w1_cols):
        h = h + w1k * x_cols[k:k + 1, :]

    h = jax.nn.sigmoid(h)                     # nn.Sigmoid() on the EUP, f32

    # Layer 2: out[c, b] = sum_j w2[c, j] * h[j, b] + b2[c]
    # per-class multiply + sublane reduction -> lane-dense (1, n) rows.
    rows = [jnp.sum(w2c * h, axis=0, keepdims=True) for w2c in w2_cols]
    return jnp.concatenate(rows, axis=0) + b2c


def _affine_columns(x_cols, w_cols, bc):
    """nonlinear=False path: both layers folded into out[c,b] = sum_k W[c,k]*x[k,b] + b[c]."""
    out = bc                                  # (C, 1) broadcasts on first FMA
    for k, wk in enumerate(w_cols):
        out = out + wk * x_cols[k:k + 1, :]
    return out


# ---------------------------------------------------------------------------
# Kernels
# ---------------------------------------------------------------------------

def _mlp_kernel_whole(x_ref, w1_ref, b1_ref, w2_ref, b2_ref, o_ref):
    """Gridless path: whole arrays resident in VMEM."""
    w1, w2t = w1_ref[...], w2_ref[...]
    o_ref[...] = _mlp_columns(
        x_ref[...],
        [w1[:, k:k + 1] for k in range(w1.shape[1])], b1_ref[...],
        [w2t[:, c:c + 1] for c in range(w2t.shape[1])], b2_ref[...],
    ).astype(o_ref.dtype)


def _mlp_kernel_tiled(x_ref, w1_ref, b1_ref, w2_ref, b2_ref, o_ref):
    """Grid path: one (in_f, block_b) x-tile / (C, block_b) out-tile per step."""
    w1, b1c, w2t, b2c = w1_ref[...], b1_ref[...], w2_ref[...], b2_ref[...]
    hidden = w1.shape[0]
    # Hoist the per-feature / per-class weight-column lane-broadcasts out of
    # the sub-chunk loop (broadcast_in_dim is not CSE'd inside the scf.for).
    w1_cols = [pl.broadcast_to(w1[:, k:k + 1], (hidden, _LANE_CHUNK))
               for k in range(w1.shape[1])]
    w2_cols = [pl.broadcast_to(w2t[:, c:c + 1], (hidden, _LANE_CHUNK))
               for c in range(w2t.shape[1])]

    n_sub = o_ref.shape[-1] // _LANE_CHUNK    # block_b is a multiple of _LANE_CHUNK

    @pl.loop(0, n_sub)
    def _(c):
        start = pl.multiple_of(c * _LANE_CHUNK, _LANE_CHUNK)
        cols = x_ref[:, pl.ds(start, _LANE_CHUNK)]
        o_ref[:, pl.ds(start, _LANE_CHUNK)] = _mlp_columns(
            cols, w1_cols, b1c, w2_cols, b2c).astype(o_ref.dtype)


def _affine_kernel_whole(x_ref, w_ref, b_ref, o_ref):
    w = w_ref[...]
    o_ref[...] = _affine_columns(
        x_ref[...], [w[:, k:k + 1] for k in range(w.shape[1])], b_ref[...]
    ).astype(o_ref.dtype)


def _affine_kernel_tiled(x_ref, w_ref, b_ref, o_ref):
    w, bc = w_ref[...], b_ref[...]
    w_cols = [pl.broadcast_to(w[:, k:k + 1], (w.shape[0], _LANE_CHUNK))
              for k in range(w.shape[1])]
    n_sub = o_ref.shape[-1] // _LANE_CHUNK

    @pl.loop(0, n_sub)
    def _(c):
        start = pl.multiple_of(c * _LANE_CHUNK, _LANE_CHUNK)
        cols = x_ref[:, pl.ds(start, _LANE_CHUNK)]
        o_ref[:, pl.ds(start, _LANE_CHUNK)] = _affine_columns(
            cols, w_cols, bc).astype(o_ref.dtype)


# ---------------------------------------------------------------------------
# One-time parameter preparation (hoisted off the per-forward hot path)
# ---------------------------------------------------------------------------

def prepare_params(w1, b1, w2, b2, *, nonlinear=True):
    """w1: (hidden, in), b1: (hidden,), w2: (classes, hidden), b2: (classes,)."""
    w1 = jnp.asarray(w1, jnp.float32)
    b1 = jnp.asarray(b1, jnp.float32)
    w2 = jnp.asarray(w2, jnp.float32)
    b2 = jnp.asarray(b2, jnp.float32)
    if nonlinear:
        return dict(
            nonlinear=True,
            w1=w1,                                # (H, in_f)   PyTorch layout
            b1c=b1.reshape(-1, 1),                # (H, 1)      column vector
            w2t=w2.T,                             # (H, C)      column per class
            b2c=b2.reshape(-1, 1),                # (C, 1)
        )
    # Identity activation -> network is affine: fold both layers into one.
    w_fused = jnp.dot(w2, w1, precision="highest")                 # (C, in_f)
    b_fused = (jnp.dot(w2, b1, precision="highest") + b2).reshape(-1, 1)  # (C, 1)
    return dict(nonlinear=False, w=w_fused, bc=b_fused)


# ---------------------------------------------------------------------------
# Forward wrapper
# ---------------------------------------------------------------------------

def xor_classifier_forward(x, params, *, block_b=32768,
                           gridless_max_b=_GRIDLESS_MAX_B,
                           feature_major_io=False):
    """XORClassifier forward.

    Default contract matches the PyTorch module: x (B, in_features) ->
    (B, num_classes) float32.  With feature_major_io=True the caller passes x
    as (in_features, B) and receives (num_classes, B) directly, skipping the
    boundary transposes (layout plumbing stays with the caller).
    """
    x = jnp.asarray(x, jnp.float32)
    x_t = x if feature_major_io else x.T          # (in_f, B): batch on lanes
    in_f, B = x_t.shape

    if params["nonlinear"]:
        whole_kernel, tiled_kernel = _mlp_kernel_whole, _mlp_kernel_tiled
        weights = (params["w1"], params["b1c"], params["w2t"], params["b2c"])
        num_classes = params["b2c"].shape[0]
    else:
        whole_kernel, tiled_kernel = _affine_kernel_whole, _affine_kernel_tiled
        weights = (params["w"], params["bc"])
        num_classes = params["bc"].shape[0]

    if B <= gridless_max_b:
        # Small / mid batch: no grid at all -> no pipeline prologue/epilogue
        # or per-step overhead; whole arrays live in VMEM.
        out_t = pl.pallas_call(
            whole_kernel,
            out_shape=jax.ShapeDtypeStruct((num_classes, B), jnp.float32),
            in_specs=[pl.BlockSpec(memory_space=pltpu.MemorySpace.VMEM)
                      for _ in range(1 + len(weights))],
            out_specs=pl.BlockSpec(memory_space=pltpu.MemorySpace.VMEM),
            compiler_params=pltpu.CompilerParams(vmem_limit_bytes=_VMEM_LIMIT),
        )(x_t, *weights)
    else:
        # Large batch: stream x / out in big lane-dense batch tiles; weights
        # stay VMEM-resident via constant index_maps.  Tile size is capped at
        # ceil(B/2) (rounded up to the sub-chunk) so there are always >= 2
        # "parallel" grid steps for v7x's two TensorCores; the ragged last
        # tile is read-padded / write-masked by Pallas (no wrapper pad/slice).
        tb = min(block_b, -(-B // 2))
        tb = -(-tb // _LANE_CHUNK) * _LANE_CHUNK
        num_steps = -(-B // tb)

        x_spec = pl.BlockSpec((in_f, tb), lambda i: (0, i))
        w_specs = [pl.BlockSpec(w.shape, lambda i: (0, 0)) for w in weights]
        out_spec = pl.BlockSpec((num_classes, tb), lambda i: (0, i))

        out_t = pl.pallas_call(
            tiled_kernel,
            out_shape=jax.ShapeDtypeStruct((num_classes, B), jnp.float32),
            grid=(num_steps,),
            in_specs=[x_spec] + w_specs,
            out_specs=out_spec,
            compiler_params=pltpu.CompilerParams(
                vmem_limit_bytes=_VMEM_LIMIT,
                dimension_semantics=("parallel",)),
        )(x_t, *weights)

    return out_t if feature_major_io else out_t.T


# ---------------------------------------------------------------------------
# Demo / self-check
# ---------------------------------------------------------------------------

if __name__ == "__main__":
    in_features = 2
    hidden_features = 32
    num_classes = 2
    batch = 8

    key = jax.random.PRNGKey(0)
    kx, kxb, kw1, kb1, kw2, kb2 = jax.random.split(key, 6)

    # Parameter init mirroring the module: weight.data.normal_(0, 1);
    # biases keep PyTorch's default U(-1/sqrt(fan_in), 1/sqrt(fan_in)).
    w1 = jax.random.normal(kw1, (hidden_features, in_features), jnp.float32)
    b1 = jax.random.uniform(kb1, (hidden_features,), jnp.float32,
                            minval=-1.0 / jnp.sqrt(in_features),
                            maxval=1.0 / jnp.sqrt(in_features))
    w2 = jax.random.normal(kw2, (num_classes, hidden_features), jnp.float32)
    b2 = jax.random.uniform(kb2, (num_classes,), jnp.float32,
                            minval=-1.0 / jnp.sqrt(hidden_features),
                            maxval=1.0 / jnp.sqrt(hidden_features))

    x = jax.random.uniform(kx, (batch, in_features), jnp.float32)

    # --- nonlinear=True (Sigmoid), small batch: gridless feature-major kernel
    params_nl = prepare_params(w1, b1, w2, b2, nonlinear=True)
    out = jax.block_until_ready(xor_classifier_forward(x, params_nl))
    ref = jax.nn.sigmoid(x @ w1.T + b1) @ w2.T + b2
    assert out.shape == (batch, num_classes)
    assert jnp.allclose(out, ref, atol=1e-5, rtol=1e-5)

    # --- nonlinear=False (Identity): both layers folded into one affine kernel
    params_lin = prepare_params(w1, b1, w2, b2, nonlinear=False)
    out_lin = jax.block_until_ready(xor_classifier_forward(x, params_lin))
    ref_lin = (x @ w1.T + b1) @ w2.T + b2
    assert out_lin.shape == (batch, num_classes)
    assert jnp.allclose(out_lin, ref_lin, atol=1e-4, rtol=1e-4)

    # --- larger batch through both paths (thresholds shrunk so the demo stays small)
    big_b = 10000                      # not a multiple of the tile: ragged last tile
    x_big = jax.random.uniform(kxb, (big_b, in_features), jnp.float32)
    ref_big = jax.nn.sigmoid(x_big @ w1.T + b1) @ w2.T + b2

    # (a) default thresholds: gridless whole-array path at a mid-size batch
    out_mid = jax.block_until_ready(xor_classifier_forward(x_big, params_nl))
    assert out_mid.shape == (big_b, num_classes)
    assert jnp.allclose(out_mid, ref_big, atol=1e-5, rtol=1e-5)

    # (b) batch-tiled streaming path: 3 "parallel" grid steps of 4096 rows
    #     (2 x 2048-column sub-chunks each), ragged last tile masked by Pallas.
    out_big = jax.block_until_ready(
        xor_classifier_forward(x_big, params_nl, block_b=4096, gridless_max_b=2048))
    assert out_big.shape == (big_b, num_classes)
    assert jnp.allclose(out_big, ref_big, atol=1e-5, rtol=1e-5)

    # (c) tiled path for the fused affine (nonlinear=False) kernel
    out_big_lin = jax.block_until_ready(
        xor_classifier_forward(x_big, params_lin, block_b=4096, gridless_max_b=2048))
    assert jnp.allclose(out_big_lin, (x_big @ w1.T + b1) @ w2.T + b2,
                        atol=1e-4, rtol=1e-4)

    # (d) feature-major I/O: caller keeps batch-on-lanes layout, no transposes
    out_fm = jax.block_until_ready(
        xor_classifier_forward(x_big.T, params_nl, feature_major_io=True))
    assert out_fm.shape == (num_classes, big_b)
    assert jnp.allclose(out_fm, ref_big.T, atol=1e-5, rtol=1e-5)

    print("KERNEL_OK")
</pallas_src>

<mosaic_0001>
module attributes {stable_mosaic.version = 11 : i64} {
  func.func @_mlp_kernel_whole(%arg0: memref<2x8xf32, #tpu.memory_space<vmem>>, %arg1: memref<32x2xf32, #tpu.memory_space<vmem>>, %arg2: memref<32x1xf32, #tpu.memory_space<vmem>>, %arg3: memref<32x2xf32, #tpu.memory_space<vmem>>, %arg4: memref<2x1xf32, #tpu.memory_space<vmem>>, %arg5: memref<2x8xf32, #tpu.memory_space<vmem>>) attributes {dimension_semantics = [], scalar_prefetch = 0 : i64, scratch_operands = 0 : i64, tpu.core_type = #tpu.core_type<tc>} {
    %c0 = arith.constant 0 : index
    %c0_0 = arith.constant 0 : index
    %0 = vector.load %arg1[%c0, %c0_0] : memref<32x2xf32, #tpu.memory_space<vmem>>, vector<32x2xf32>
    %c0_1 = arith.constant 0 : index
    %c0_2 = arith.constant 0 : index
    %1 = vector.load %arg3[%c0_1, %c0_2] : memref<32x2xf32, #tpu.memory_space<vmem>>, vector<32x2xf32>
    %c0_3 = arith.constant 0 : index
    %c0_4 = arith.constant 0 : index
    %2 = vector.load %arg0[%c0_3, %c0_4] : memref<2x8xf32, #tpu.memory_space<vmem>>, vector<2x8xf32>
    %3 = vector.extract_strided_slice %0 {offsets = [0, 0], sizes = [32, 1], strides = [1, 1]} : vector<32x2xf32> to vector<32x1xf32>
    %4 = vector.extract_strided_slice %0 {offsets = [0, 1], sizes = [32, 1], strides = [1, 1]} : vector<32x2xf32> to vector<32x1xf32>
    %c0_5 = arith.constant 0 : index
    %c0_6 = arith.constant 0 : index
    %5 = vector.load %arg2[%c0_5, %c0_6] : memref<32x1xf32, #tpu.memory_space<vmem>>, vector<32x1xf32>
    %6 = vector.extract_strided_slice %1 {offsets = [0, 0], sizes = [32, 1], strides = [1, 1]} : vector<32x2xf32> to vector<32x1xf32>
    %7 = vector.extract_strided_slice %1 {offsets = [0, 1], sizes = [32, 1], strides = [1, 1]} : vector<32x2xf32> to vector<32x1xf32>
    %c0_7 = arith.constant 0 : index
    %c0_8 = arith.constant 0 : index
    %8 = vector.load %arg4[%c0_7, %c0_8] : memref<2x1xf32, #tpu.memory_space<vmem>>, vector<2x1xf32>
    %9 = vector.extract_strided_slice %2 {offsets = [0, 0], sizes = [1, 8], strides = [1, 1]} : vector<2x8xf32> to vector<1x8xf32>
    %10 = vector.broadcast %3 : vector<32x1xf32> to vector<32x8xf32>
    %11 = vector.broadcast %9 : vector<1x8xf32> to vector<32x8xf32>
    %12 = arith.mulf %10, %11 : vector<32x8xf32>
    %13 = vector.broadcast %5 : vector<32x1xf32> to vector<32x8xf32>
    %14 = arith.addf %13, %12 : vector<32x8xf32>
    %15 = vector.extract_strided_slice %2 {offsets = [1, 0], sizes = [1, 8], strides = [1, 1]} : vector<2x8xf32> to vector<1x8xf32>
    %16 = vector.broadcast %4 : vector<32x1xf32> to vector<32x8xf32>
    %17 = vector.broadcast %15 : vector<1x8xf32> to vector<32x8xf32>
    %18 = arith.mulf %16, %17 : vector<32x8xf32>
    %19 = arith.addf %14, %18 : vector<32x8xf32>
    %20 = arith.negf %19 : vector<32x8xf32>
    %21 = math.exp %20 : vector<32x8xf32>
    %cst = arith.constant 1.000000e+00 : f32
    %22 = vector.broadcast %cst : f32 to vector<32x8xf32>
    %23 = arith.addf %22, %21 : vector<32x8xf32>
    %24 = arith.divf %22, %23 : vector<32x8xf32>
    %25 = vector.broadcast %6 : vector<32x1xf32> to vector<32x8xf32>
    %26 = arith.mulf %25, %24 : vector<32x8xf32>
    %cst_9 = arith.constant dense<0.000000e+00> : vector<8xf32>
    %27 = vector.multi_reduction <add>, %26, %cst_9 [0] : vector<32x8xf32> to vector<8xf32>
    %28 = vector.shape_cast %27 : vector<8xf32> to vector<1x8xf32>
    %29 = vector.broadcast %7 : vector<32x1xf32> to vector<32x8xf32>
    %30 = arith.mulf %29, %24 : vector<32x8xf32>
    %cst_10 = arith.constant dense<0.000000e+00> : vector<8xf32>
    %31 = vector.multi_reduction <add>, %30, %cst_10 [0] : vector<32x8xf32> to vector<8xf32>
    %32 = vector.shape_cast %31 : vector<8xf32> to vector<1x8xf32>
    %33 = tpu.concatenate %28, %32 in 0 : vector<1x8xf32>, vector<1x8xf32> -> vector<2x8xf32>
    %34 = vector.broadcast %8 : vector<2x1xf32> to vector<2x8xf32>
    %35 = arith.addf %33, %34 : vector<2x8xf32>
    %c0_11 = arith.constant 0 : index
    %c0_12 = arith.constant 0 : index
    %36 = vector.load %arg5[%c0_11, %c0_12] : memref<2x8xf32, #tpu.memory_space<vmem>>, vector<2x8xf32>
    tpu.vector_store %arg5[%c0_11, %c0_12], %35 {strides = array<i32>} : memref<2x8xf32, #tpu.memory_space<vmem>>, vector<2x8xf32>,
    return
  }
}

</mosaic_0001>

<llo_original>
// kernel: tpu_custom_call.1
$region0: #{tpu_custom_call.1}
  #allocation0 [shape = 'u32[]', space=smem, size = 0x4, offset = 0x4, fixed_abs, tag = 'smem constant byte address 0x4 - core index']
  #allocation1 [shape = 'u32[144,128]{1,0:T(1,128)}', space=vmem, size = 0x12000, scoped, tag = 'internal scratch']
  %s0 = inlined_call_operand.vmem [shape: f32[2,8], index: 0, kind: input, shape index: {}]
  %s1 = inlined_call_operand.vmem [shape: f32[32,2], index: 1, kind: input, shape index: {}]
  %s2 = inlined_call_operand.vmem [shape: f32[32,1], index: 2, kind: input, shape index: {}]
  %s3 = inlined_call_operand.vmem [shape: f32[32,2], index: 3, kind: input, shape index: {}]
  %s4 = inlined_call_operand.vmem [shape: f32[2,1], index: 4, kind: input, shape index: {}]
  %s5 = inlined_call_operand.hbm [shape: f32[2,8], index: 5, kind: output, shape index: {}]
  %s6 = sld [smem:[#allocation0]]
  $region30: #{tpu_custom_call.1} parent=0
    _
  %s8 = ssub.s32 1, %s6
  %s9 = scalar_select 0, %s8, %s6
  $region1: #{tpu_custom_call.1} parent=0
    #allocation2 [shape = 'u8[1024]{0}', space=vmem, size = 0x400, scoped, tag = 'output window, operand 0, single buffered']
    #allocation3 [shape = 's32[1]{0}', space=sflag, size = 0x4, scoped, tag = 'scoped memory for tpu_custom_call.1']
    %10 = vsyncpa [#allocation3], 0
    // Predicated region
    $region2: #{tpu_custom_call.1} parent=1 // pred_check
      _
    $region3: #{tpu_custom_call.1} parent=1 // pred_check_branch
      %12 = sbr.rel (0) target = $region5
    $region4: #{tpu_custom_call.1} parent=1 // pred_region
      _
    $region5: #{tpu_custom_call.1} parent=1 // pred_fallthru
      _
    // Predicated region
    $region6: #{tpu_custom_call.1} parent=1 // pred_check
      _
    $region7: #{tpu_custom_call.1} parent=1 // pred_check_branch
      %14 = sbr.rel (0) target = $region9
    $region8: #{tpu_custom_call.1} parent=1 // pred_region
      _
    $region9: #{tpu_custom_call.1} parent=1 // pred_fallthru
      _
    // Predicated region
    $region10: #{tpu_custom_call.1} parent=1 // pred_check
      _
    $region11: #{tpu_custom_call.1} parent=1 // pred_check_branch
      %16 = sbr.rel (0) target = $region13
    $region12: #{tpu_custom_call.1} parent=1 // pred_region
      _
    $region13: #{tpu_custom_call.1} parent=1 // pred_fallthru
      _
    // Predicated region
    $region14: #{tpu_custom_call.1} parent=1 // pred_check
      _
    $region15: #{tpu_custom_call.1} parent=1 // pred_check_branch
      %18 = sbr.rel (0) target = $region17
    $region16: #{tpu_custom_call.1} parent=1 // pred_region
      _
    $region17: #{tpu_custom_call.1} parent=1 // pred_fallthru
      _
    // Predicated region
    $region18: #{tpu_custom_call.1} parent=1 // pred_check
      _
    $region19: #{tpu_custom_call.1} parent=1 // pred_check_branch
      %20 = sbr.rel (0) target = $region21
    $region20: #{tpu_custom_call.1} parent=1 // pred_region
      _
    $region21: #{tpu_custom_call.1} parent=1 // pred_fallthru
      _
    %v21 = vld [vmem:[%s1] sm:$0xff]
    %v22 = vld [vmem:[%s1 + $0x8] sm:$0xff]
    %v23 = vld [vmem:[%s1 + $0x10] sm:$0xff]
    %v24 = vld [vmem:[%s1 + $0x18] sm:$0xff]
    %v25 = vld [vmem:[%s3] sm:$0xff]
    %v26 = vld [vmem:[%s3 + $0x8] sm:$0xff]
    %v27 = vld [vmem:[%s3 + $0x10] sm:$0xff]
    %v28 = vld [vmem:[%s3 + $0x18] sm:$0xff]
    %v29 = vld [vmem:[%s0] sm:$0x3]
    %v30 = vld [vmem:[%s2] sm:$0xff]
    %v31 = vld [vmem:[%s2 + $0x8] sm:$0xff]
    %v32 = vld [vmem:[%s2 + $0x10] sm:$0xff]
    %v33 = vld [vmem:[%s2 + $0x18] sm:$0xff]
    %v34 = vld [vmem:[%s4] sm:$0x3]
    %36 = vset.pattern.permute.xlu0 0
    %37 = vperm.xlu0 %36, %v21
    %v38 = vpop.permute.xlu0 %37
    %41 = vset.pattern.permute.xlu0 0
    %42 = vperm.xlu0 %41, %v22
    %v43 = vpop.permute.xlu0 %42
    %46 = vset.pattern.permute.xlu0 0
    %47 = vperm.xlu0 %46, %v23
    %v48 = vpop.permute.xlu0 %47
    %51 = vset.pattern.permute.xlu0 0
    %52 = vperm.xlu0 %51, %v24
    %v53 = vpop.permute.xlu0 %52
    %v55 = vlaneseq
    %v56 = vshrl.u32 %v55, 7
    %v57 = vsub.s32 0, %v56
    %v58 = vrot.slane %v29, %v57
    %v59 = vmul.f32 %v38, %v58
    %v60 = vmul.f32 %v43, %v58
    %v61 = vmul.f32 %v48, %v58
    %v62 = vmul.f32 %v53, %v58
    %64 = vset.pattern.permute.xlu0 0
    %65 = vperm.xlu0 %64, %v30
    %v66 = vpop.permute.xlu0 %65
    %69 = vset.pattern.permute.xlu0 0
    %70 = vperm.xlu0 %69, %v31
    %v71 = vpop.permute.xlu0 %70
    %74 = vset.pattern.permute.xlu0 0
    %75 = vperm.xlu0 %74, %v32
    %v76 = vpop.permute.xlu0 %75
    %79 = vset.pattern.permute.xlu0 0
    %80 = vperm.xlu0 %79, %v33
    %v81 = vpop.permute.xlu0 %80
    %v83 = vadd.f32 %v66, %v59
    %v84 = vadd.f32 %v71, %v60
    %v85 = vadd.f32 %v76, %v61
    %v86 = vadd.f32 %v81, %v62
    %87 = vset.pattern.permute.xlu0 1
    %88 = vperm.xlu0 %87, %v21
    %v89 = vpop.permute.xlu0 %88
    %91 = vset.pattern.permute.xlu0 1
    %92 = vperm.xlu0 %91, %v22
    %v93 = vpop.permute.xlu0 %92
    %95 = vset.pattern.permute.xlu0 1
    %96 = vperm.xlu0 %95, %v23
    %v97 = vpop.permute.xlu0 %96
    %99 = vset.pattern.permute.xlu0 1
    %100 = vperm.xlu0 %99, %v24
    %v101 = vpop.permute.xlu0 %100
    %v103 = vlaneseq
    %v104 = vshrl.u32 %v103, 7
    %v105 = vsub.s32 1, %v104
    %v106 = vrot.slane %v29, %v105
    %v107 = vmul.f32 %v89, %v106
    %v108 = vmul.f32 %v93, %v106
    %v109 = vmul.f32 %v97, %v106
    %v110 = vmul.f32 %v101, %v106
    %v111 = vadd.f32 %v83, %v107
    %v112 = vadd.f32 %v84, %v108
    %v113 = vadd.f32 %v85, %v109
    %v114 = vadd.f32 %v86, %v110
    %v115 = vxor.u32 %v111, 2147483648
    %v116 = vxor.u32 %v112, 2147483648
    %v117 = vxor.u32 %v113, 2147483648
    %v118 = vxor.u32 %v114, 2147483648
    %v119 = vmul.f32 %v115, 1.442695
    %v120 = vpow.pop %v119
    %v121 = vmul.f32 %v116, 1.442695
    %v122 = vpow.pop %v121
    %v123 = vmul.f32 %v117, 1.442695
    %v124 = vpow.pop %v123
    %v125 = vmul.f32 %v118, 1.442695
    %v126 = vpow.pop %v125
    %v127 = vadd.f32 %v120, 1.0
    %v128 = vadd.f32 %v122, 1.0
    %v129 = vadd.f32 %v124, 1.0
    %v130 = vadd.f32 %v126, 1.0
    %v131 = vrcp.pop %v127
    %v132 = vmul.f32 1.0, %v131
    %v133 = vrcp.pop %v128
    %v134 = vmul.f32 1.0, %v133
    %v135 = vrcp.pop %v129
    %v136 = vmul.f32 1.0, %v135
    %v137 = vrcp.pop %v130
    %v138 = vmul.f32 1.0, %v137
    %140 = vset.pattern.permute.xlu0 0
    %141 = vperm.xlu0 %140, %v25
    %v142 = vpop.permute.xlu0 %141
    %145 = vset.pattern.permute.xlu0 0
    %146 = vperm.xlu0 %145, %v26
    %v147 = vpop.permute.xlu0 %146
    %150 = vset.pattern.permute.xlu0 0
    %151 = vperm.xlu0 %150, %v27
    %v152 = vpop.permute.xlu0 %151
    %155 = vset.pattern.permute.xlu0 0
    %156 = vperm.xlu0 %155, %v28
    %v157 = vpop.permute.xlu0 %156
    %v159 = vmul.f32 %v142, %v132
    %v160 = vmul.f32 %v147, %v134
    %v161 = vmul.f32 %v152, %v136
    %v162 = vmul.f32 %v157, %v138
    %vm163 = vcmask 64512
    %v164 = vsel %vm163, %v159, 0.0
    %v165 = vsel %vm163, %v160, 0.0
    %v166 = vadd.f32 %v164, %v165
    %v167 = vsel %vm163, %v161, 0.0
    %v168 = vadd.f32 %v166, %v167
    %v169 = vsel %vm163, %v162, 0.0
    %v170 = vadd.f32 %v168, %v169
    %v171 = vrot.slane %v170, 4
    %v172 = vadd.f32 %v170, %v171
    %v173 = vrot.slane %v172, 2
    %v174 = vadd.f32 %v172, %v173
    %v175 = vrot.slane %v174, 1
    %v176 = vadd.f32 %v174, %v175
    %177 = vset.pattern.permute.xlu0 1
    %178 = vperm.xlu0 %177, %v25
    %v179 = vpop.permute.xlu0 %178
    %181 = vset.pattern.permute.xlu0 1
    %182 = vperm.xlu0 %181, %v26
    %v183 = vpop.permute.xlu0 %182
    %185 = vset.pattern.permute.xlu0 1
    %186 = vperm.xlu0 %185, %v27
    %v187 = vpop.permute.xlu0 %186
    %189 = vset.pattern.permute.xlu0 1
    %190 = vperm.xlu0 %189, %v28
    %v191 = vpop.permute.xlu0 %190
    %v193 = vmul.f32 %v179, %v132
    %v194 = vmul.f32 %v183, %v134
    %v195 = vmul.f32 %v187, %v136
    %v196 = vmul.f32 %v191, %v138
    %v197 = vsel %vm163, %v193, 0.0
    %v198 = vsel %vm163, %v194, 0.0
    %v199 = vadd.f32 %v197, %v198
    %v200 = vsel %vm163, %v195, 0.0
    %v201 = vadd.f32 %v199, %v200
    %v202 = vsel %vm163, %v196, 0.0
    %v203 = vadd.f32 %v201, %v202
    %v204 = vrot.slane %v203, 4
    %v205 = vadd.f32 %v203, %v204
    %v206 = vrot.slane %v205, 2
    %v207 = vadd.f32 %v205, %v206
    %v208 = vrot.slane %v207, 1
    %v209 = vadd.f32 %v207, %v208
    %vm210 = vcmask 1040384
    %v211 = vsel %vm210, %v176, %v209
    %213 = vset.pattern.permute.xlu0 0
    %214 = vperm.xlu0 %213, %v34
    %v215 = vpop.permute.xlu0 %214
    %v217 = vadd.f32 %v211, %v215
    %vm218 = vcmask 58368
    %219 = vst.msk [vmem:[#allocation2] sm:$0x3] %vm218, %v217
    // Predicated region
    $region22: #{tpu_custom_call.1} parent=1 // pred_check
      _
    $region23: #{tpu_custom_call.1} parent=1 // pred_check_branch
      %221 = sbr.rel (0) target = $region25
    $region24: #{tpu_custom_call.1} parent=1 // pred_region
      %s223 = ssub.s32 32, 32
      %224 = vsyncadd [#allocation3], %s223
      %s226 = sshll.u32 [#allocation2], 4
      %s227 = int_to_ptr.vmem [resolvable:$true] %s226
      %229 = dma.vmem_to_hbm [thread:$0]  %s227, 32, %s5, [#allocation3]
    $region25: #{tpu_custom_call.1} parent=1 // pred_fallthru
      _
    // Predicated region
    $region26: #{tpu_custom_call.1} parent=1 // pred_check
      _
    $region27: #{tpu_custom_call.1} parent=1 // pred_check_branch
      %231 = sbr.rel (0) target = $region29
    $region28: #{tpu_custom_call.1} parent=1 // pred_region
      %232 = dma.done [#allocation3], 32
    $region29: #{tpu_custom_call.1} parent=1 // pred_fallthru
      _
    %233 = vsyncpa [#allocation3], 1

</llo_original>
